<compile_context>
chip_gen: v5e
topology: v5e:2x2
jax: 0.10.0
libtpu: 0.0.40
codegen_flags: <defaults>
</compile_context>

<pallas_src>
import functools

import jax
import jax.numpy as jnp
from jax.experimental import pallas as pl
from jax.experimental.pallas import tpu as pltpu


# ----------------------------------------------------------------------------
# Layout / tiling policy (shared by param prep and forward)
# ----------------------------------------------------------------------------
_TM_MAX = 256        # M tile cap (multiple of the 8/16/32 sublane packs)
_TK_MAX = 1024       # K tile cap; K <= this -> one full-dim K block, no padding
_TN_MAX = 512        # N tile cap when N is lane (128) aligned
_TN_FULL_MAX = 2048  # unaligned N up to this -> one full-dim N block, no padding


def _round_up(x: int, m: int) -> int:
    return ((x + m - 1) // m) * m


def _k_layout(K: int):
    """Returns (tk, Kp): K tile size and persistently-padded K."""
    if K <= _TK_MAX:
        return K, K                          # full-dim K block, zero padding
    return _TK_MAX, _round_up(K, _TK_MAX)


def _n_layout(N: int) -> int:
    """Returns Np: persistently-padded N stored in the weight/bias layout."""
    if N % 128 == 0 or N <= _TN_FULL_MAX:
        return N                             # aligned, or full-dim block is fine
    return _round_up(N, 128)                 # large & unaligned: pad once


def _select_tiles(B: int, Kp: int, Np: int):
    """Returns (tm, tk, tn, Mp)."""
    if B <= _TM_MAX:
        tm, Mp = B, B                        # full-dim M block: no M padding
    else:
        tm, Mp = _TM_MAX, _round_up(B, _TM_MAX)
    tk = Kp if Kp <= _TK_MAX else _TK_MAX
    if Np % 128 == 0:
        tn = min(_TN_MAX, Np)
        # Single M block (small batch): give the N axis >= 2 blocks so both
        # TensorCores on a v7x chip get work.
        if Mp == tm and Np // tn < 2:
            half = Np // 2
            if half >= 128 and half % 128 == 0:
                tn = half
    else:
        tn = Np                              # full-dim (unaligned, moderate) N
    return tm, tk, tn, Mp


def _vmem_limit_bytes(tm, tk, tn, multi_k, x_dtype, w_dtype, o_dtype) -> int:
    """Exact double-buffered footprint + 25% headroom (never below 32 MiB)."""
    sub_tm = _round_up(tm, 8)
    lane_tn = _round_up(tn, 128)
    lane_tk = _round_up(tk, 128)
    xi = jnp.dtype(x_dtype).itemsize
    wi = jnp.dtype(w_dtype).itemsize
    oi = jnp.dtype(o_dtype).itemsize
    x_b = 2 * sub_tm * lane_tk * xi
    w_b = 2 * _round_up(tk, 8) * lane_tn * wi
    b_b = 2 * 8 * lane_tn * wi               # (1, tn) pads to 8 sublanes
    o_b = 2 * sub_tm * lane_tn * oi
    acc_b = sub_tm * lane_tn * 4 if multi_k else 0
    total = x_b + w_b + b_b + o_b + acc_b
    return max(int(total * 1.25), 32 * 2**20)


def _apply_activation(y, activation: str):
    if activation == "sigmoid":
        return jax.nn.sigmoid(y)
    if activation == "relu":
        return jnp.maximum(y, 0.0)
    if activation == "tanh":
        return jnp.tanh(y)
    if activation == "identity":
        return y
    raise ValueError(f"unsupported activation: {activation}")


# ----------------------------------------------------------------------------
# Kernels
# ----------------------------------------------------------------------------
def _decoder_kernel_fused(x_ref, wt_ref, b_ref, o_ref, *, activation: str):
    """Single-K-block path: o = act(x @ W + b). No scratch, no pl.when."""
    y = jnp.dot(x_ref[...], wt_ref[...], preferred_element_type=jnp.float32)
    y = y + b_ref[...].astype(jnp.float32)            # (1, tn) broadcasts
    o_ref[...] = _apply_activation(y, activation).astype(o_ref.dtype)


def _decoder_kernel_acc(x_ref, wt_ref, b_ref, o_ref, acc_ref, *, activation: str):
    """Multi-K path: f32 accumulator; bias folded into the k==0 init."""
    k = pl.program_id(2)

    @pl.when(k == 0)
    def _():
        acc_ref[...] = (jnp.zeros(acc_ref.shape, jnp.float32)
                        + b_ref[...].astype(jnp.float32))

    acc_ref[...] += jnp.dot(x_ref[...], wt_ref[...],
                            preferred_element_type=jnp.float32)

    @pl.when(k == pl.num_programs(2) - 1)
    def _():
        o_ref[...] = _apply_activation(acc_ref[...], activation).astype(o_ref.dtype)


# ----------------------------------------------------------------------------
# Forward wrapper
# ----------------------------------------------------------------------------
@functools.partial(jax.jit, static_argnames=("activation", "out_features"))
def decoder_forward(x, wt, b2, *, activation: str = "sigmoid", out_features=None):
    """Pallas equivalent of Decoder.forward.

    Args:
      x:  [B, in_features]                 input_data
      wt: [Kp, Np]                         weight from prepare_decoder_params
                                           (transposed + persistently padded)
      b2: [1, Np]                          bias from prepare_decoder_params
      activation:   static activation name
      out_features: true N (static); needed only when N was padded at prep time

    Returns:
      [B, out_features] = activation(x @ W.T + b)
    """
    B, K = x.shape
    Kp_w, Np = wt.shape
    tk0, Kp = _k_layout(K)
    if Kp_w != Kp:
        raise ValueError("weight not in prepared layout; call prepare_decoder_params")
    if b2.shape != (1, Np):
        raise ValueError("bias not in prepared layout; call prepare_decoder_params")
    N = out_features if out_features is not None else Np

    tm, tk, tn, Mp = _select_tiles(B, Kp, Np)

    # Only the (small) activation tensor is padded per call; weight/bias were
    # padded once, persistently, at prepare time.
    if Mp != B or Kp != K:
        x = jnp.pad(x, ((0, Mp - B), (0, Kp - K)))

    mi, ni, ki = Mp // tm, Np // tn, Kp // tk
    out_dtype = x.dtype

    cost = pl.CostEstimate(
        flops=2 * B * K * N,
        transcendentals=(B * N) if activation in ("sigmoid", "tanh") else 0,
        bytes_accessed=(B * K * jnp.dtype(x.dtype).itemsize
                        + Kp * Np * jnp.dtype(wt.dtype).itemsize
                        + Np * jnp.dtype(b2.dtype).itemsize
                        + B * N * jnp.dtype(out_dtype).itemsize),
    )

    if ki == 1:
        kernel = functools.partial(_decoder_kernel_fused, activation=activation)
        grid_spec = pltpu.PrefetchScalarGridSpec(
            num_scalar_prefetch=0,
            grid=(mi, ni),
            in_specs=[
                pl.BlockSpec((tm, Kp), lambda i, j: (i, 0)),
                pl.BlockSpec((Kp, tn), lambda i, j: (0, j)),
                pl.BlockSpec((1, tn), lambda i, j: (0, j)),
            ],
            out_specs=pl.BlockSpec((tm, tn), lambda i, j: (i, j)),
        )
        dims = ("parallel", "parallel")
    else:
        kernel = functools.partial(_decoder_kernel_acc, activation=activation)
        grid_spec = pltpu.PrefetchScalarGridSpec(
            num_scalar_prefetch=0,
            grid=(mi, ni, ki),
            in_specs=[
                pl.BlockSpec((tm, tk), lambda i, j, k: (i, k)),
                pl.BlockSpec((tk, tn), lambda i, j, k: (k, j)),
                pl.BlockSpec((1, tn), lambda i, j, k: (0, j)),
            ],
            out_specs=pl.BlockSpec((tm, tn), lambda i, j, k: (i, j)),
            scratch_shapes=[pltpu.VMEM((tm, tn), jnp.float32)],
        )
        dims = ("parallel", "parallel", "arbitrary")

    out = pl.pallas_call(
        kernel,
        out_shape=jax.ShapeDtypeStruct((Mp, Np), out_dtype),
        grid_spec=grid_spec,
        compiler_params=pltpu.CompilerParams(
            dimension_semantics=dims,
            vmem_limit_bytes=_vmem_limit_bytes(tm, tk, tn, ki > 1,
                                               x.dtype, wt.dtype, out_dtype),
        ),
        cost_estimate=cost,
    )(x, wt, b2)

    if Mp != B or Np != N:
        out = out[:B, :N]
    return out


# ----------------------------------------------------------------------------
# Parameter init / one-time prep (synthetic; not a checkpoint load)
# ----------------------------------------------------------------------------
def init_decoder_params(key, in_features: int, out_features: int, dtype=jnp.float32):
    """PyTorch-layout (w:[out,in], b:[out]) params, U(-1/sqrt(in), 1/sqrt(in))."""
    kw, kb = jax.random.split(key)
    bound = 1.0 / (in_features ** 0.5)
    w = jax.random.uniform(kw, (out_features, in_features), dtype, -bound, bound)
    b = jax.random.uniform(kb, (out_features,), dtype, -bound, bound)
    return w, b


def prepare_decoder_params(w, b, dtype=None):
    """One-time persistent re-layout: transpose to [in, out] and pad K/N so no
    weight/bias padding happens inside the jitted forward. Optionally cast the
    params (e.g. dtype=jnp.bfloat16 on v5e to halve weight HBM traffic; the
    MXU accumulation stays f32)."""
    if dtype is not None:
        w = w.astype(dtype)
        b = b.astype(dtype)
    wt = jnp.transpose(w)                    # [K, N]
    K, N = wt.shape
    _, Kp = _k_layout(K)
    Np = _n_layout(N)
    if Kp != K or Np != N:
        wt = jnp.pad(wt, ((0, Kp - K), (0, Np - N)))
    b2 = (jnp.pad(b, (0, Np - N)) if Np != N else b).reshape(1, Np)
    return wt, b2


if __name__ == "__main__":
    # Small shapes consistent with Decoder(in_features, out_features)
    batch = 8
    in_features = 32       # latent dim z for the VAE decoder
    out_features = 128     # reconstructed feature dim

    key = jax.random.PRNGKey(0)
    kx, kp = jax.random.split(key)

    x = jax.random.normal(kx, (batch, in_features), dtype=jnp.float32)
    w, b = init_decoder_params(kp, in_features, out_features)

    # Persistent weight re-layout + padding (outside the jitted forward).
    wt, b2 = prepare_decoder_params(w, b)

    # Pallas kernel (activation = Sigmoid, typical VAE decoder output activation)
    out = decoder_forward(x, wt, b2, activation="sigmoid", out_features=out_features)
    out = jax.block_until_ready(out)

    # Pure-JAX reference check against the original PyTorch-layout weight.
    ref = jax.nn.sigmoid(x @ w.T + b)
    assert out.shape == (batch, out_features)
    assert jnp.allclose(out, ref, atol=1e-5, rtol=1e-5), "mismatch vs reference"

    print("KERNEL_OK")
</pallas_src>

<mosaic_0001>
module attributes {stable_mosaic.version = 11 : i64} {
  func.func @_decoder_kernel_fused(%arg0: i32, %arg1: i32, %arg2: memref<8x32xf32, #tpu.memory_space<vmem>>, %arg3: memref<32x128xf32, #tpu.memory_space<vmem>>, %arg4: memref<1x128xf32, #tpu.memory_space<vmem>>, %arg5: memref<8x128xf32, #tpu.memory_space<vmem>>) attributes {dimension_semantics = [#tpu.dimension_semantics<parallel>, #tpu.dimension_semantics<parallel>], iteration_bounds = array<i64: 1, 1>, scalar_prefetch = 0 : i64, scratch_operands = 0 : i64, tpu.core_type = #tpu.core_type<tc>, window_params = [{transform_indices = @transform_0, window_bounds = array<i64: 8, 32>}, {transform_indices = @transform_1, window_bounds = array<i64: 32, 128>}, {transform_indices = @transform_2, window_bounds = array<i64: 1, 128>}, {transform_indices = @transform_3, window_bounds = array<i64: 8, 128>}]} {
    %c0 = arith.constant 0 : index
    %c0_0 = arith.constant 0 : index
    %0 = vector.load %arg2[%c0, %c0_0] : memref<8x32xf32, #tpu.memory_space<vmem>>, vector<8x32xf32>
    %c0_1 = arith.constant 0 : index
    %c0_2 = arith.constant 0 : index
    %1 = vector.load %arg3[%c0_1, %c0_2] : memref<32x128xf32, #tpu.memory_space<vmem>>, vector<32x128xf32>
    %cst = arith.constant dense<0.000000e+00> : vector<8x128xf32>
    %2 = tpu.matmul %0, %1, %cst {dimension_numbers = #tpu.dot_dimension_numbers<[1], [0], [0], [1], [0, 0, 1, 1], [], []>} : vector<8x32xf32>, vector<32x128xf32>, vector<8x128xf32> -> vector<8x128xf32>
    %c0_3 = arith.constant 0 : index
    %c0_4 = arith.constant 0 : index
    %3 = vector.load %arg4[%c0_3, %c0_4] : memref<1x128xf32, #tpu.memory_space<vmem>>, vector<1x128xf32>
    %4 = vector.broadcast %3 : vector<1x128xf32> to vector<8x128xf32>
    %5 = arith.addf %2, %4 : vector<8x128xf32>
    %6 = arith.negf %5 : vector<8x128xf32>
    %7 = math.exp %6 : vector<8x128xf32>
    %cst_5 = arith.constant 1.000000e+00 : f32
    %8 = vector.broadcast %cst_5 : f32 to vector<8x128xf32>
    %9 = arith.addf %8, %7 : vector<8x128xf32>
    %10 = arith.divf %8, %9 : vector<8x128xf32>
    %c0_6 = arith.constant 0 : index
    %c0_7 = arith.constant 0 : index
    %11 = vector.load %arg5[%c0_6, %c0_7] : memref<8x128xf32, #tpu.memory_space<vmem>>, vector<8x128xf32>
    tpu.vector_store %arg5[%c0_6, %c0_7], %10 {strides = array<i32>} : memref<8x128xf32, #tpu.memory_space<vmem>>, vector<8x128xf32>,
    return
  }
  func.func @transform_0(%arg0: i32, %arg1: i32) -> (i32, i32) {
    %c0_i32 = arith.constant 0 : i32
    %c0_i32_0 = arith.constant 0 : i32
    return %arg0, %c0_i32 : i32, i32
  }
  func.func @transform_1(%arg0: i32, %arg1: i32) -> (i32, i32) {
    %c0_i32 = arith.constant 0 : i32
    %c0_i32_0 = arith.constant 0 : i32
    return %c0_i32, %arg1 : i32, i32
  }
  func.func @transform_2(%arg0: i32, %arg1: i32) -> (i32, i32) {
    %c0_i32 = arith.constant 0 : i32
    %c0_i32_0 = arith.constant 0 : i32
    return %c0_i32, %arg1 : i32, i32
  }
  func.func @transform_3(%arg0: i32, %arg1: i32) -> (i32, i32) {
    %c0_i32 = arith.constant 0 : i32
    return %arg0, %arg1 : i32, i32
  }
}

</mosaic_0001>

<llo_original>
// kernel: decoder_forward.1
$region0: #{decoder_forward.1}
  #allocation0 [shape = 'u32[]', space=smem, size = 0x4, offset = 0x4, fixed_abs, tag = 'smem constant byte address 0x4 - core index']
  #allocation1 [shape = 'u32[72,128]{1,0:T(1,128)}', space=vmem, size = 0x9000, scoped, tag = 'internal scratch']
  %s0 = inlined_call_operand.hbm [shape: f32[8,32], index: 0, kind: input, shape index: {}]
  %s1 = inlined_call_operand.hbm [shape: f32[32,128], index: 1, kind: input, shape index: {}]
  %s2 = inlined_call_operand.vmem [shape: f32[1,128], index: 2, kind: input, shape index: {}]
  %s3 = inlined_call_operand.hbm [shape: f32[8,128], index: 3, kind: output, shape index: {}]
  %s4 = sld [smem:[#allocation0]]
  $region30: #{decoder_forward.1} parent=0
    _
  %s6 = ssub.s32 1, %s4
  %s7 = scalar_select 0, %s6, %s4
  $region1: #{decoder_forward.1} parent=0
    #allocation2 [shape = 'u8[4096]{0}', space=vmem, size = 0x1000, scoped, tag = 'input window, operand 0, single buffered']
    #allocation3 [shape = 's32[1]{0}', space=sflag, size = 0x4, scoped, tag = 'scoped memory for decoder_forward.1']
    #allocation4 [shape = 's32[1]{0}', space=sflag, size = 0x4, scoped, tag = 'scoped memory for decoder_forward.1']
    #allocation5 [shape = 'u8[16384]{0}', space=vmem, size = 0x4000, scoped, tag = 'input window, operand 1, single buffered']
    #allocation6 [shape = 's32[1]{0}', space=sflag, size = 0x4, scoped, tag = 'scoped memory for decoder_forward.1']
    #allocation7 [shape = 'u8[4096]{0}', space=vmem, size = 0x1000, scoped, tag = 'output window, operand 0, single buffered']
    %8 = vsyncpa [#allocation3], 0
    %9 = vsyncpa [#allocation6], 0
    %10 = vsyncpa [#allocation4], 0
    // Predicated region
    $region2: #{decoder_forward.1} parent=1 // pred_check
      _
    $region3: #{decoder_forward.1} parent=1 // pred_check_branch
      %12 = sbr.rel (0) target = $region5
    $region4: #{decoder_forward.1} parent=1 // pred_region
      %14 = vsyncadd [#allocation3], 0
      %s16 = sshll.u32 %s0, 4
      %s17 = int_to_ptr.hbm [resolvable:$true] %s16
      %s18 = sshll.u32 [#allocation2], 4
      %s19 = int_to_ptr.vmem [resolvable:$true] %s18
      %21 = dma.hbm_to_vmem [thread:$0]  %s17, 128, %s19, [#allocation3]
    $region5: #{decoder_forward.1} parent=1 // pred_fallthru
      _
    // Predicated region
    $region6: #{decoder_forward.1} parent=1 // pred_check
      _
    $region7: #{decoder_forward.1} parent=1 // pred_check_branch
      %23 = sbr.rel (0) target = $region9
    $region8: #{decoder_forward.1} parent=1 // pred_region
      %25 = vsyncadd [#allocation6], 0
      %s26 = sshll.u32 %s1, 4
      %s27 = int_to_ptr.hbm [resolvable:$true] %s26
      %s28 = sshll.u32 [#allocation5], 4
      %s29 = int_to_ptr.vmem [resolvable:$true] %s28
      %34 = dma.hbm_to_vmem [thread:$0]  %s27, 512, %s29, [#allocation6], 128, 128, 8
    $region9: #{decoder_forward.1} parent=1 // pred_fallthru
      _
    // Predicated region
    $region10: #{decoder_forward.1} parent=1 // pred_check
      _
    $region11: #{decoder_forward.1} parent=1 // pred_check_branch
      %36 = sbr.rel (0) target = $region13
    $region12: #{decoder_forward.1} parent=1 // pred_region
      _
    $region13: #{decoder_forward.1} parent=1 // pred_fallthru
      _
    // Predicated region
    $region14: #{decoder_forward.1} parent=1 // pred_check
      _
    $region15: #{decoder_forward.1} parent=1 // pred_check_branch
      %38 = sbr.rel (0) target = $region17
    $region16: #{decoder_forward.1} parent=1 // pred_region
      %40 = dma.done [#allocation3], 128
    $region17: #{decoder_forward.1} parent=1 // pred_fallthru
      _
    // Predicated region
    $region18: #{decoder_forward.1} parent=1 // pred_check
      _
    $region19: #{decoder_forward.1} parent=1 // pred_check_branch
      %42 = sbr.rel (0) target = $region21
    $region20: #{decoder_forward.1} parent=1 // pred_region
      %44 = dma.done [#allocation6], 512
    $region21: #{decoder_forward.1} parent=1 // pred_fallthru
      _
    %v45 = vld [vmem:[#allocation2] sm:$0xff]
    %v46 = vld [vmem:[#allocation5] sm:$0xff]
    %v47 = vld [vmem:[#allocation5 + $0x8] sm:$0xff]
    %v48 = vld [vmem:[#allocation5 + $0x10] sm:$0xff]
    %v49 = vld [vmem:[#allocation5 + $0x18] sm:$0xff]
    %v50 = vld [vmem:[%s2] sm:$0x1]
    %v52 = vperm.slane %v50, 0
    %vm54 = vcmask 261120
    %v56 = vsel %vm54, %v45, 0
    %58 = vmatpush.msra.mxu0 0.0
    %59 = vmatpush.msra.mxu0 0.0
    %60 = vmatpush.msra.mxu0 0.0
    %61 = vmatpush.msra.mxu0 0.0
    %62 = vmatpush.msra.mxu0 0.0
    %63 = vmatpush.msra.mxu0 0.0
    %64 = vmatpush.msra.mxu0 0.0
    %65 = vmatpush.msra.mxu0 0.0
    %66 = vmatpush.msra.mxu0 0.0
    %67 = vmatpush.msra.mxu0 0.0
    %68 = vmatpush.msra.mxu0 0.0
    %69 = vmatpush.msra.mxu0 0.0
    %70 = vmatpush.msra.mxu0 %v49
    %71 = vmatpush.msra.mxu0 %v48
    %72 = vmatpush.msra.mxu0 %v47
    %73 = vmatpush.msra.mxu0 %v46
    %74 = vmatmul.f32.gmra.mxu0 %v56
    %v75 = vpop.f32.mrf.mxu0
    %v76 = vadd.f32 %v52, %v75
    %77 = vdwg.mxu0
    %v78 = vxor.u32 %v76, 2147483648
    %v79 = vmul.f32 %v78, 1.442695
    %v80 = vpow.pop %v79
    %v81 = vadd.f32 %v80, 1.0
    %v82 = vrcp.pop %v81
    %v83 = vmul.f32 %v81, %v82
    %v84 = vsub.f32 1.0, %v83
    %v85 = vmul.f32 %v82, %v84
    %v86 = vadd.f32 %v82, %v85
    %vm87 = vweird.f32 %v81
    %vm88 = vweird.f32 %v82
    %vm89 = vmor %vm87, %vm88
    %v90 = vsel %vm89, %v82, %v86
    %v91 = vand.u32 2147483647, %v81
    %vm92 = vcmp.eq.f32.partialorder %v91, 8.507059e+37
    %v93 = vand.u32 %v81, 2147483648
    %v94 = vor.u32 1.1754944e-38, %v93
    %v95 = vsel %vm92, %v94, %v90
    %v96 = vmul.f32 1.0, %v95
    %97 = vst [vmem:[#allocation7] sm:$0xff] %v96
    // Predicated region
    $region22: #{decoder_forward.1} parent=1 // pred_check
      _
    $region23: #{decoder_forward.1} parent=1 // pred_check_branch
      %99 = sbr.rel (0) target = $region25
    $region24: #{decoder_forward.1} parent=1 // pred_region
      %101 = vsyncadd [#allocation4], 0
      %s103 = sshll.u32 [#allocation7], 4
      %s104 = int_to_ptr.vmem [resolvable:$true] %s103
      %s105 = sshll.u32 %s3, 4
      %s106 = int_to_ptr.hbm [resolvable:$true] %s105
      %108 = dma.vmem_to_hbm [thread:$0]  %s104, 128, %s106, [#allocation4]
    $region25: #{decoder_forward.1} parent=1 // pred_fallthru
      _
    // Predicated region
    $region26: #{decoder_forward.1} parent=1 // pred_check
      _
    $region27: #{decoder_forward.1} parent=1 // pred_check_branch
      %110 = sbr.rel (0) target = $region29
    $region28: #{decoder_forward.1} parent=1 // pred_region
      %112 = dma.done [#allocation4], 128
    $region29: #{decoder_forward.1} parent=1 // pred_fallthru
      _
    %113 = vsyncpa [#allocation3], 1
    %114 = vsyncpa [#allocation6], 1
    %115 = vsyncpa [#allocation4], 1

</llo_original>
